<compile_context>
chip_gen: v7x
topology: tpu7x:2x2x1
jax: 0.10.0
libtpu: 0.0.40
codegen_flags: <defaults>
</compile_context>

<pallas_src>
import functools

import jax
import jax.numpy as jnp
from jax import lax
from jax.experimental import pallas as pl
from jax.experimental.pallas import tpu as pltpu


def _round_up(x, m):
    return ((x + m - 1) // m) * m


def _vmem_tile_bytes(g, rows, cols, itemsize):
    """VMEM footprint of a (g, rows, cols) slab after (8, 128) layout tiling."""
    return g * _round_up(max(rows, 1), 8) * _round_up(max(cols, 1), 128) * itemsize


def _vmem_budgets():
    """(block budget for tile sizing, vmem_limit_bytes) for this TPU generation."""
    phys = None
    try:
        phys = getattr(pltpu.get_tpu_info(), "vmem_capacity_bytes", None)
    except Exception:
        phys = None
    if not phys:
        phys = 64 * 1024 * 1024  # conservative fallback (v7x-sized VMEM)
    block_budget = min(56 * 1024 * 1024, (phys * 7) // 16)
    vmem_limit = min((phys * 3) // 4, 2 * block_budget)
    return int(block_budget), int(vmem_limit)


def _pick_tile(n, unit, cap):
    """Tile size (multiple of `unit`, <= cap) and padded extent, minimizing padding
    (ties broken toward the larger tile)."""
    if n <= cap:
        t = _round_up(n, unit)
        return t, t
    best_t, best_pad = None, None
    t = (cap // unit) * unit
    while t >= unit:
        p = _round_up(n, t)
        if best_pad is None or p < best_pad:
            best_t, best_pad = t, p
        t -= unit
    return best_t, best_pad


def _sim_matrix_kernel(a_ref, b_ref, o_ref, a_norm_ref, *, eps):
    # a_ref: (G, TI, D), b_ref: (G, TJ, D), o_ref: (G, TI, TJ),
    # a_norm_ref: (G, TI, D) VMEM scratch in the MXU operand dtype.
    eps2 = eps * eps

    # The a block is resident across the innermost ("arbitrary") j axis:
    # normalize it once per (n, i) tile and cache the result.
    # a / max(||a||, eps) == a * rsqrt(max(||a||^2, eps^2))  -> one EUP op per row.
    @pl.when(pl.program_id(2) == 0)
    def _():
        a = a_ref[...].astype(jnp.float32)
        inv_a = lax.rsqrt(jnp.maximum(jnp.sum(a * a, axis=-1, keepdims=True), eps2))
        a_norm_ref[...] = (a * inv_a).astype(a_norm_ref.dtype)

    b = b_ref[...].astype(jnp.float32)
    inv_b = lax.rsqrt(jnp.maximum(jnp.sum(b * b, axis=-1, keepdims=True), eps2))
    b_norm = (b * inv_b).astype(a_norm_ref.dtype)

    # Batched A @ B^T on the MXU; contraction on the last dim of both operands
    # (same lowering as flash-attention q.k^T — no explicit transpose of b).
    sim = lax.dot_general(
        a_norm_ref[...], b_norm,
        dimension_numbers=(((2,), (2,)), ((0,), (0,))),
        preferred_element_type=jnp.float32,
    )
    o_ref[...] = sim.astype(o_ref.dtype)


def sim_matrix(a: jax.Array, b: jax.Array, eps: float = 1e-8,
               *, use_bf16_mxu: bool = False) -> jax.Array:
    """Cosine-similarity matrix: a [B,H,I,D], b [B,H,J,D] -> [B,H,I,J]."""
    B, H, I, D = a.shape
    Bb, Hb, J, Db = b.shape
    assert (B, H, D) == (Bb, Hb, Db), "batch/head/feature dims must match"

    BH = B * H
    out_dtype = jnp.promote_types(a.dtype, b.dtype)
    # bf16 operands into the MXU (normalization + accumulation stay f32) is a
    # 2-4x MXU win on v6e/v7x; auto-enabled when inputs are already bf16.
    mxu_dtype = (jnp.bfloat16
                 if (use_bf16_mxu
                     or (a.dtype == jnp.bfloat16 and b.dtype == jnp.bfloat16))
                 else jnp.float32)

    block_budget, vmem_limit = _vmem_budgets()

    # Tile sizes.  TI grows first (its block is only TI x D and b is re-fetched
    # ceil(I/TI) times); TJ is a multiple of 128 so output stores are lane-dense.
    TI, I_pad = _pick_tile(I, 8, 1024)
    TJ, J_pad = _pick_tile(J, 128, 512)

    in_isz = jnp.dtype(a.dtype).itemsize
    out_isz = jnp.dtype(out_dtype).itemsize
    scr_isz = jnp.dtype(mxu_dtype).itemsize

    def footprint(g, ti, tj):
        a_blk = _vmem_tile_bytes(g, ti, D, in_isz)
        b_blk = _vmem_tile_bytes(g, tj, D, in_isz)
        o_blk = _vmem_tile_bytes(g, ti, tj, out_isz)
        dbuf = 2 * (a_blk + b_blk + o_blk)               # double-buffered blocks
        scratch = _vmem_tile_bytes(g, ti, D, scr_isz)    # cached a_norm
        temps = (_vmem_tile_bytes(g, ti, D, 4)           # a in f32 (at j == 0)
                 + 2 * _vmem_tile_bytes(g, tj, D, 4)     # b in f32 + b_norm
                 + _vmem_tile_bytes(g, ti, tj, 4))       # f32 matmul result
        return dbuf + scratch + temps

    # Shrink tiles until a single-group step fits the budget.
    while footprint(1, TI, TJ) > block_budget and (TJ > 128 or TI > 8):
        if TJ > 128:
            TJ = max(128, ((TJ // 2) // 128) * 128)
            J_pad = _round_up(J, TJ)
        else:
            TI = max(8, ((TI // 2) // 8) * 8)
            I_pad = _round_up(I, TI)

    i_tiles = I_pad // TI
    j_tiles = J_pad // TJ

    # Group size G: largest divisor of BH fitting the budget, then clamped so the
    # parallel (n, i) axes keep >=2 points (megacore) and the grid keeps a few
    # steps of pipeline depth (DMA/compute overlap).
    divisors = [d for d in range(1, BH + 1) if BH % d == 0]
    G = 1
    for cand in divisors:
        if footprint(cand, TI, TJ) <= block_budget:
            G = cand

    def _grid_ok(g):
        par_pts = (BH // g) * i_tiles
        steps = par_pts * j_tiles
        return (par_pts >= min(2, BH * i_tiles)
                and steps >= min(8, BH * i_tiles * j_tiles))

    idx = divisors.index(G)
    while idx > 0 and not _grid_ok(divisors[idx]):
        idx -= 1
    G = divisors[idx]

    grid = (BH // G, i_tiles, j_tiles)

    a_f = a.reshape(BH, I, D)
    b_f = b.reshape(BH, J, D)
    if I_pad != I:
        a_f = jnp.pad(a_f, ((0, 0), (0, I_pad - I), (0, 0)))
    if J_pad != J:
        b_f = jnp.pad(b_f, ((0, 0), (0, J_pad - J), (0, 0)))

    cost = pl.CostEstimate(
        flops=2 * BH * I_pad * J_pad * D,
        # a_norm cached across j; b_norm recomputed once per i tile.
        transcendentals=BH * (I_pad + J_pad * i_tiles),
        bytes_accessed=int(a_f.size * in_isz
                           + b_f.size * in_isz * i_tiles      # b re-fetched per i tile
                           + BH * I_pad * J_pad * out_isz),
    )

    out = pl.pallas_call(
        functools.partial(_sim_matrix_kernel, eps=float(eps)),
        out_shape=jax.ShapeDtypeStruct((BH, I_pad, J_pad), out_dtype),
        grid_spec=pltpu.PrefetchScalarGridSpec(
            num_scalar_prefetch=0,
            grid=grid,
            in_specs=[
                pl.BlockSpec((G, TI, D), lambda n, i, j: (n, i, 0)),
                pl.BlockSpec((G, TJ, D), lambda n, i, j: (n, j, 0)),
            ],
            out_specs=pl.BlockSpec((G, TI, TJ), lambda n, i, j: (n, i, j)),
            scratch_shapes=[pltpu.VMEM((G, TI, D), mxu_dtype)],
        ),
        compiler_params=pltpu.CompilerParams(
            # j is innermost and "arbitrary" so the cached a_norm scratch is always
            # (re)initialized at j == 0 on whichever core owns the (n, i) point.
            dimension_semantics=("parallel", "parallel", "arbitrary"),
            vmem_limit_bytes=int(vmem_limit),
        ),
        cost_estimate=cost,
    )(a_f, b_f)

    out = out[:, :I, :J]
    return out.reshape(B, H, I, J)


def _reference(a, b, eps=1e-8):
    a_n = jnp.linalg.norm(a, axis=-1, keepdims=True)
    b_n = jnp.linalg.norm(b, axis=-1, keepdims=True)
    a_norm = a / jnp.maximum(a_n, eps)
    b_norm = b / jnp.maximum(b_n, eps)
    return jnp.einsum("bhid,bhjd->bhij", a_norm, b_norm)


if __name__ == "__main__":
    key = jax.random.PRNGKey(0)
    k1, k2 = jax.random.split(key)

    B, H, I, J, D = 2, 4, 8, 16, 32
    a = jax.random.normal(k1, (B, H, I, D), dtype=jnp.float32)
    b = jax.random.normal(k2, (B, H, J, D), dtype=jnp.float32)

    out = sim_matrix(a, b)
    jax.block_until_ready(out)

    ref = _reference(a, b)
    assert out.shape == (B, H, I, J)
    assert jnp.allclose(out, ref, atol=1e-5, rtol=1e-5)

    # bf16-operand MXU fast path (normalization stays f32): looser tolerance.
    out_bf16 = sim_matrix(a, b, use_bf16_mxu=True)
    jax.block_until_ready(out_bf16)
    assert out_bf16.shape == (B, H, I, J)
    assert jnp.allclose(out_bf16, ref, atol=5e-2, rtol=5e-2)

    print("KERNEL_OK")
</pallas_src>

<mosaic_0001>
module attributes {stable_mosaic.version = 11 : i64} {
  func.func @_sim_matrix_kernel(%arg0: i32, %arg1: i32, %arg2: i32, %arg3: memref<1x8x32xf32, #tpu.memory_space<vmem>>, %arg4: memref<1x128x32xf32, #tpu.memory_space<vmem>>, %arg5: memref<1x8x128xf32, #tpu.memory_space<vmem>>, %arg6: memref<1x8x32xf32, #tpu.memory_space<vmem>>) attributes {dimension_semantics = [#tpu.dimension_semantics<parallel>, #tpu.dimension_semantics<parallel>, #tpu.dimension_semantics<arbitrary>], iteration_bounds = array<i64: 8, 1, 1>, scalar_prefetch = 0 : i64, scratch_operands = 1 : i64, tpu.core_type = #tpu.core_type<tc>, window_params = [{transform_indices = @transform_0, window_bounds = array<i64: 1, 8, 32>}, {transform_indices = @transform_1, window_bounds = array<i64: 1, 128, 32>}, {transform_indices = @transform_2, window_bounds = array<i64: 1, 8, 128>}]} {
    %c0_i32 = arith.constant 0 : i32
    %0 = arith.cmpi eq, %arg2, %c0_i32 : i32
    %1 = arith.extui %0 : i1 to i32
    %c0_i32_0 = arith.constant 0 : i32
    %2 = arith.cmpi ne, %1, %c0_i32_0 : i32
    scf.if %2 {
      %c0_11 = arith.constant 0 : index
      %c0_12 = arith.constant 0 : index
      %c0_13 = arith.constant 0 : index
      %15 = vector.load %arg3[%c0_11, %c0_12, %c0_13] : memref<1x8x32xf32, #tpu.memory_space<vmem>>, vector<1x8x32xf32>
      %16 = arith.mulf %15, %15 : vector<1x8x32xf32>
      %cst_14 = arith.constant dense<0.000000e+00> : vector<1x8xf32>
      %17 = vector.multi_reduction <add>, %16, %cst_14 [2] : vector<1x8x32xf32> to vector<1x8xf32>
      %18 = vector.shape_cast %17 : vector<1x8xf32> to vector<1x8x1xf32>
      %cst_15 = arith.constant 1.000000e-16 : f32
      %19 = vector.broadcast %cst_15 : f32 to vector<1x8x1xf32>
      %20 = arith.maximumf %18, %19 : vector<1x8x1xf32>
      %21 = math.rsqrt %20 : vector<1x8x1xf32>
      %22 = vector.broadcast %21 : vector<1x8x1xf32> to vector<1x8x32xf32>
      %23 = arith.mulf %15, %22 : vector<1x8x32xf32>
      %c0_16 = arith.constant 0 : index
      %c0_17 = arith.constant 0 : index
      %c0_18 = arith.constant 0 : index
      %24 = vector.load %arg6[%c0_16, %c0_17, %c0_18] : memref<1x8x32xf32, #tpu.memory_space<vmem>>, vector<1x8x32xf32>
      tpu.vector_store %arg6[%c0_16, %c0_17, %c0_18], %23 {strides = array<i32>} : memref<1x8x32xf32, #tpu.memory_space<vmem>>, vector<1x8x32xf32>,
    } else {
    }
    %c0 = arith.constant 0 : index
    %c0_1 = arith.constant 0 : index
    %c0_2 = arith.constant 0 : index
    %3 = vector.load %arg4[%c0, %c0_1, %c0_2] : memref<1x128x32xf32, #tpu.memory_space<vmem>>, vector<1x128x32xf32>
    %4 = arith.mulf %3, %3 : vector<1x128x32xf32>
    %cst = arith.constant dense<0.000000e+00> : vector<1x128xf32>
    %5 = vector.multi_reduction <add>, %4, %cst [2] : vector<1x128x32xf32> to vector<1x128xf32>
    %6 = vector.shape_cast %5 : vector<1x128xf32> to vector<1x128x1xf32>
    %cst_3 = arith.constant 1.000000e-16 : f32
    %7 = vector.broadcast %cst_3 : f32 to vector<1x128x1xf32>
    %8 = arith.maximumf %6, %7 : vector<1x128x1xf32>
    %9 = math.rsqrt %8 : vector<1x128x1xf32>
    %10 = vector.broadcast %9 : vector<1x128x1xf32> to vector<1x128x32xf32>
    %11 = arith.mulf %3, %10 : vector<1x128x32xf32>
    %c0_4 = arith.constant 0 : index
    %c0_5 = arith.constant 0 : index
    %c0_6 = arith.constant 0 : index
    %12 = vector.load %arg6[%c0_4, %c0_5, %c0_6] : memref<1x8x32xf32, #tpu.memory_space<vmem>>, vector<1x8x32xf32>
    %cst_7 = arith.constant dense<0.000000e+00> : vector<1x8x128xf32>
    %13 = tpu.matmul %12, %11, %cst_7 {dimension_numbers = #tpu.dot_dimension_numbers<[2], [2], [1], [1], [0, 0, 0, 1, 1, 1], [0], [0]>} : vector<1x8x32xf32>, vector<1x128x32xf32>, vector<1x8x128xf32> -> vector<1x8x128xf32>
    %c0_8 = arith.constant 0 : index
    %c0_9 = arith.constant 0 : index
    %c0_10 = arith.constant 0 : index
    %14 = vector.load %arg5[%c0_8, %c0_9, %c0_10] : memref<1x8x128xf32, #tpu.memory_space<vmem>>, vector<1x8x128xf32>
    tpu.vector_store %arg5[%c0_8, %c0_9, %c0_10], %13 {strides = array<i32>} : memref<1x8x128xf32, #tpu.memory_space<vmem>>, vector<1x8x128xf32>,
    return
  }
  func.func @transform_0(%arg0: i32, %arg1: i32, %arg2: i32) -> (i32, i32, i32) {
    %c0_i32 = arith.constant 0 : i32
    %c0_i32_0 = arith.constant 0 : i32
    return %arg0, %arg1, %c0_i32 : i32, i32, i32
  }
  func.func @transform_1(%arg0: i32, %arg1: i32, %arg2: i32) -> (i32, i32, i32) {
    %c0_i32 = arith.constant 0 : i32
    %c0_i32_0 = arith.constant 0 : i32
    return %arg0, %arg2, %c0_i32 : i32, i32, i32
  }
  func.func @transform_2(%arg0: i32, %arg1: i32, %arg2: i32) -> (i32, i32, i32) {
    %c0_i32 = arith.constant 0 : i32
    return %arg0, %arg1, %arg2 : i32, i32, i32
  }
}

</mosaic_0001>

<llo_original>
// kernel: tpu_custom_call.1
$region0: #{tpu_custom_call.1}
  #allocation0 [shape = 'u32[]', space=smem, size = 0x4, offset = 0x4, fixed_abs, tag = 'smem constant byte address 0x4 - core index']
  #allocation1 [shape = 'u32[144,128]{1,0:T(1,128)}', space=vmem, size = 0x12000, scoped, tag = 'internal scratch']
  #allocation2 [shape = 'f32[1,8,32]{2,1,0:T(8,128)}', space=vmem, size = 0x1000, scoped, tag = 'scratch operand']
  %s0 = inlined_call_operand.vmem [shape: f32[8,8,32], index: 0, kind: input, shape index: {}]
  %s1 = inlined_call_operand.vmem [shape: f32[8,128,32], index: 1, kind: input, shape index: {}]
  %s2 = inlined_call_operand.hbm [shape: f32[8,8,128], index: 2, kind: output, shape index: {}]
  %s3 = sld [smem:[#allocation0]]
  $region45: #{tpu_custom_call.1} parent=0
    _
  %s5 = ssub.s32 1, %s3
  %s6 = scalar_select 0, %s5, %s3
  $region1: #{tpu_custom_call.1} parent=0
    #allocation3 [shape = 'u8[8192]{0}', space=vmem, size = 0x2000, scoped, tag = 'output window, operand 0']
    #allocation4 [shape = 's32[2]{0}', space=sflag, size = 0x8, scoped, tag = 'scoped memory for tpu_custom_call.1']
    %7 = vsyncpa [#allocation4], 0
    %s8 = scalar_lea.sflag [#allocation4], 1
    %9 = vsyncpa %s8, 0
    loop: start=0, step=1, limit=10
    $region2: #{tpu_custom_call.1} parent=1 // loop_pre_header
      _
    $region3: #{tpu_custom_call.1} parent=1 // loop_header
      %s11 = sphi 0, %s15
      %p12 = scmp.ge.s32.totalorder %s11, 10
      %s18 = sphi 0, %s37
      %s19 = sphi 0, %s33
      %s20 = sphi 0, %s29
      %s21 = sphi 0, %s18
      %s22 = sphi 0, %s19
      %s23 = sphi 0, %s20
      %s24 = sphi 0, %s21
      %s25 = sphi 0, %s22
      %s26 = sphi 0, %s23
      %s42 = sphi 0, %s44
      %s45 = sphi 0, %s42
      %s46 = sphi 0, %s45
      %s62 = sphi 0, %s46
      %s70 = sphi 0, %s72
      %s73 = sphi 0, %s70
      %s74 = sphi 0, %s73
      %s90 = sphi 0, %s74
      %s100 = sphi 0, %s102
      %s103 = sphi 0, %s100
      %s104 = sphi 0, %s103
      %s120 = sphi 0, %s104
    $region4: #{tpu_custom_call.1} parent=1 // loop_header_branch
      %14 = sbr.rel (%p12) target = $region8
    $region5: #{tpu_custom_call.1} parent=1 // loop_body
      %s16 = ssub.s32 %s11, 1
      %s17 = ssub.s32 %s11, 2
      %s27 = sadd.s32 1, %s20
      %p28 = scmp.ge.s32.totalorder %s27, 1
      %s29 = scalar_select %p28, 0, %s27
      %s30 = sadd.s32 1, %s19
      %s31 = scalar_select %p28, %s30, %s19
      %p32 = scmp.ge.s32.totalorder %s31, 1
      %s33 = scalar_select %p32, 0, %s31
      %s34 = sadd.s32 1, %s18
      %s35 = scalar_select %p32, %s34, %s18
      %p36 = scmp.ge.s32.totalorder %s35, 8
      %s37 = scalar_select %p36, 0, %s35
      %s38 = ssub.s32 %s18, %s37
      %s39 = ssub.s32 %s19, %s33
      %s40 = sor.u32 %s38, %s39
      %p41 = scmp.eq.s32.totalorder %s40, 0
      %s43 = sadd.s32 %s42, 1
      %s44 = scalar_select %p41, %s42, %s43
      %p47 = pneg %p41
      %p48 = scmp.eq.s32.totalorder %s11, 7
      %p49 = por %p47, %p48
      %p50 = scmp.ne.s32.totalorder %s42, %s45
      %p51 = scmp.eq.s32.totalorder %s11, 0
      %p52 = por %p50, %p51
      %p53 = scmp.ne.s32.totalorder %s42, %s45
      %p54 = scmp.eq.s32.totalorder %s16, 7
      %p55 = por %p53, %p54
      %p56 = scmp.ne.s32.totalorder %s45, %s46
      %p57 = scmp.eq.s32.totalorder %s16, 0
      %p58 = por %p56, %p57
      %p59 = scmp.ne.s32.totalorder %s45, %s46
      %p60 = scmp.eq.s32.totalorder %s17, 7
      %p61 = por %p59, %p60
      %p63 = scmp.ne.s32.totalorder %s46, %s62
      %p64 = scmp.eq.s32.totalorder %s17, 0
      %p65 = por %p63, %p64
      %s66 = ssub.s32 %s18, %s37
      %s67 = ssub.s32 %s20, %s29
      %s68 = sor.u32 %s66, %s67
      %p69 = scmp.eq.s32.totalorder %s68, 0
      %s71 = sadd.s32 %s70, 1
      %s72 = scalar_select %p69, %s70, %s71
      %p75 = pneg %p69
      %p76 = scmp.eq.s32.totalorder %s11, 7
      %p77 = por %p75, %p76
      %p78 = scmp.ne.s32.totalorder %s70, %s73
      %p79 = scmp.eq.s32.totalorder %s11, 0
      %p80 = por %p78, %p79
      %p81 = scmp.ne.s32.totalorder %s70, %s73
      %p82 = scmp.eq.s32.totalorder %s16, 7
      %p83 = por %p81, %p82
      %p84 = scmp.ne.s32.totalorder %s73, %s74
      %p85 = scmp.eq.s32.totalorder %s16, 0
      %p86 = por %p84, %p85
      %p87 = scmp.ne.s32.totalorder %s73, %s74
      %p88 = scmp.eq.s32.totalorder %s17, 7
      %p89 = por %p87, %p88
      %p91 = scmp.ne.s32.totalorder %s74, %s90
      %p92 = scmp.eq.s32.totalorder %s17, 0
      %p93 = por %p91, %p92
      %s94 = ssub.s32 %s18, %s37
      %s95 = ssub.s32 %s19, %s33
      %s96 = sor.u32 %s94, %s95
      %s97 = ssub.s32 %s20, %s29
      %s98 = sor.u32 %s96, %s97
      %p99 = scmp.eq.s32.totalorder %s98, 0
      %s101 = sadd.s32 %s100, 1
      %s102 = scalar_select %p99, %s100, %s101
      %p105 = pneg %p99
      %p106 = scmp.eq.s32.totalorder %s11, 7
      %p107 = por %p105, %p106
      %p108 = scmp.ne.s32.totalorder %s100, %s103
      %p109 = scmp.eq.s32.totalorder %s11, 0
      %p110 = por %p108, %p109
      %p111 = scmp.ne.s32.totalorder %s100, %s103
      %p112 = scmp.eq.s32.totalorder %s16, 7
      %p113 = por %p111, %p112
      %p114 = scmp.ne.s32.totalorder %s103, %s104
      %p115 = scmp.eq.s32.totalorder %s16, 0
      %p116 = por %p114, %p115
      %p117 = scmp.ne.s32.totalorder %s103, %s104
      %p118 = scmp.eq.s32.totalorder %s17, 7
      %p119 = por %p117, %p118
      %p121 = scmp.ne.s32.totalorder %s104, %s120
      %p122 = scmp.eq.s32.totalorder %s17, 0
      %p123 = por %p121, %p122
      %p124 = scmp.le.s32.totalorder 1, %s11
      %p125 = scmp.lt.s32.totalorder %s11, 9
      %p126 = pnand %p124, %p125
      %p127 = pneg %p126
      // Predicated region
      $region9: #{tpu_custom_call.1} parent=5 // pred_check
        _
      $region10: #{tpu_custom_call.1} parent=5 // pred_check_branch
        %129 = sbr.rel (%p126) target = $region12
      $region11: #{tpu_custom_call.1} parent=5 // pred_region
        %s130 = ssub.s32 %s11, 1
      $region12: #{tpu_custom_call.1} parent=5 // pred_fallthru
        _
      %p131 = scmp.lt.s32.totalorder %s11, 8
      // Predicated region
      $region13: #{tpu_custom_call.1} parent=5 // pred_check
        %p132 = pneg %p131
      $region14: #{tpu_custom_call.1} parent=5 // pred_check_branch
        %134 = sbr.rel (%p132) target = $region16
      $region15: #{tpu_custom_call.1} parent=5 // pred_region
        // Predicated region
        $region17: #{tpu_custom_call.1} parent=15 // pred_check
          %p135 = pneg %p52
        $region18: #{tpu_custom_call.1} parent=15 // pred_check_branch
          %137 = sbr.rel (%p135) target = $region20
        $region19: #{tpu_custom_call.1} parent=15 // pred_region
          %p138 = scmp.lt.s32.totalorder %s18, 7
          %s139 = scalar_select %p138, %s18, 7
          %p140 = scmp.lt.s32.totalorder %s19, 0
          %s141 = scalar_select %p140, %s19, 0
          %s142 = sadd.s32 %s141, %s139
          %s143 = smul.addr %s142, 8
          %s144 = scalar_lea.vmem %s0, %s143
        $region20: #{tpu_custom_call.1} parent=15 // pred_fallthru
          _
        // Predicated region
        $region21: #{tpu_custom_call.1} parent=15 // pred_check
          %p145 = pneg %p80
        $region22: #{tpu_custom_call.1} parent=15 // pred_check_branch
          %147 = sbr.rel (%p145) target = $region24
        $region23: #{tpu_custom_call.1} parent=15 // pred_region
          %s148 = smul.u32 16, %s20
          %p149 = scmp.lt.s32.totalorder %s18, 7
          %s150 = scalar_select %p149, %s18, 7
          %p151 = scmp.lt.s32.totalorder %s148, 15
          %s152 = scalar_select %p151, %s148, 15
          %s153 = smul.addr %s150, 16
          %s154 = sadd.s32 %s152, %s153
          %s155 = smul.addr %s154, 8
          %s156 = scalar_lea.vmem %s1, %s155
          %s157 = smul.u32 16, %s20
        $region24: #{tpu_custom_call.1} parent=15 // pred_fallthru
          _
      $region16: #{tpu_custom_call.1} parent=5 // pred_fallthru
        _
      %p158 = scmp.le.s32.totalorder 1, %s11
      %p159 = scmp.lt.s32.totalorder %s11, 9
      %p160 = pnand %p158, %p159
      %p161 = pneg %p160
      // Predicated region
      $region25: #{tpu_custom_call.1} parent=5 // pred_check
        _
      $region26: #{tpu_custom_call.1} parent=5 // pred_check_branch
        %163 = sbr.rel (%p160) target = $region28
      $region27: #{tpu_custom_call.1} parent=5 // pred_region
        %s164 = ssub.s32 %s11, 1
        %p165 = scmp.lt.s32.totalorder %s21, 7
        %s166 = scalar_select %p165, %s21, 7
        %p167 = scmp.lt.s32.totalorder %s22, 0
        %s168 = scalar_select %p167, %s22, 0
        %s169 = sadd.s32 %s168, %s166
        %s170 = smul.addr %s169, 8
        %s171 = scalar_lea.vmem %s0, %s170
        %p172 = pneg %p58
        %p173 = pneg %p55
        %s174 = smul.u32 16, %s23
        %p175 = scmp.lt.s32.totalorder %s21, 7
        %s176 = scalar_select %p175, %s21, 7
        %p177 = scmp.lt.s32.totalorder %s174, 15
        %s178 = scalar_select %p177, %s174, 15
        %s179 = smul.addr %s176, 16
        %s180 = sadd.s32 %s178, %s179
        %s181 = smul.addr %s180, 8
        %s182 = scalar_lea.vmem %s1, %s181
        %p183 = pneg %p86
        %p184 = pneg %p83
        %p185 = pneg %p116
        %p186 = pneg %p113
        %s187 = sand.u32 %s103, 1
        %s188 = scalar_lea.sflag [#allocation4], %s187
        %s189 = sand.u32 %s103, 1
        %s190 = smul.addr %s189, 8
        %s191 = scalar_lea.vmem [#allocation3], %s190
        %p192 = scmp.lt.s32.totalorder %s21, 7
        %s193 = scalar_select %p192, %s21, 7
        %p194 = scmp.lt.s32.totalorder %s22, 0
        %s195 = scalar_select %p194, %s22, 0
        %s196 = sadd.s32 %s195, %s193
        %s197 = smul.addr %s196, 8
        %s198 = scalar_lea.vmem %s0, %s197
        %s199 = smul.u32 16, %s23
        %p200 = scmp.lt.s32.totalorder %s21, 7
        %s201 = scalar_select %p200, %s21, 7
        %p202 = scmp.lt.s32.totalorder %s199, 15
        %s203 = scalar_select %p202, %s199, 15
        %s204 = smul.addr %s201, 16
        %s205 = sadd.s32 %s203, %s204
        %s206 = smul.addr %s205, 8
        %s207 = scalar_lea.vmem %s1, %s206
        %s208 = smul.u32 16, %s23
        %p209 = scmp.eq.s32.totalorder %s23, 0
        // Predicated region
        $region29: #{tpu_custom_call.1} parent=27 // pred_check
          %p210 = pneg %p209
        $region30: #{tpu_custom_call.1} parent=27 // pred_check_branch
          %212 = sbr.rel (%p210) target = $region32
        $region31: #{tpu_custom_call.1} parent=27 // pred_region
          %v213 = vld [vmem:[%s198] sm:$0xff]
          %v214 = vmul.f32 %v213, %v213
          %vm215 = vcmask 261120
          %v216 = vsel %vm215, %v214, 0.0
          %217 = vadd.xlane.f32.xlu0 %v216
          %v218 = vpop.xlane.xlu0 %217
          %v219 = vmax.f32 %v218, 1e-16
          %v220 = vrsqrt.pop %v219
          %v221 = vmul.f32 %v213, %v220
          %222 = vst.msk [vmem:[#allocation2] sm:$0xff] %vm215, %v221
        $region32: #{tpu_custom_call.1} parent=27 // pred_fallthru
          _
        %v223 = vld [vmem:[%s207] sm:$0xff]
        %v224 = vld [vmem:[%s207 + $0x8] sm:$0xff]
        %v225 = vld [vmem:[%s207 + $0x10] sm:$0xff]
        %v226 = vld [vmem:[%s207 + $0x18] sm:$0xff]
        %v227 = vld [vmem:[%s207 + $0x20] sm:$0xff]
        %v228 = vld [vmem:[%s207 + $0x28] sm:$0xff]
        %v229 = vld [vmem:[%s207 + $0x30] sm:$0xff]
        %v230 = vld [vmem:[%s207 + $0x38] sm:$0xff]
        %v231 = vld [vmem:[%s207 + $0x40] sm:$0xff]
        %v232 = vld [vmem:[%s207 + $0x48] sm:$0xff]
        %v233 = vld [vmem:[%s207 + $0x50] sm:$0xff]
        %v234 = vld [vmem:[%s207 + $0x58] sm:$0xff]
        %v235 = vld [vmem:[%s207 + $0x60] sm:$0xff]
        %v236 = vld [vmem:[%s207 + $0x68] sm:$0xff]
        %v237 = vld [vmem:[%s207 + $0x70] sm:$0xff]
        %v238 = vld [vmem:[%s207 + $0x78] sm:$0xff]
        %v239 = vmul.f32 %v223, %v223
        %v240 = vmul.f32 %v224, %v224
        %v241 = vmul.f32 %v225, %v225
        %v242 = vmul.f32 %v226, %v226
        %v243 = vmul.f32 %v227, %v227
        %v244 = vmul.f32 %v228, %v228
        %v245 = vmul.f32 %v229, %v229
        %v246 = vmul.f32 %v230, %v230
        %v247 = vmul.f32 %v231, %v231
        %v248 = vmul.f32 %v232, %v232
        %v249 = vmul.f32 %v233, %v233
        %v250 = vmul.f32 %v234, %v234
        %v251 = vmul.f32 %v235, %v235
        %v252 = vmul.f32 %v236, %v236
        %v253 = vmul.f32 %v237, %v237
        %v254 = vmul.f32 %v238, %v238
        %vm255 = vcmask 261120
        %v256 = vsel %vm255, %v239, 0.0
        %257 = vadd.xlane.f32.xlu0 %v256
        %v258 = vpop.xlane.xlu0 %257
        %v259 = vsel %vm255, %v240, 0.0
        %260 = vadd.xlane.f32.xlu0 %v259
        %v261 = vpop.xlane.xlu0 %260
        %v262 = vsel %vm255, %v241, 0.0
        %263 = vadd.xlane.f32.xlu0 %v262
        %v264 = vpop.xlane.xlu0 %263
        %v265 = vsel %vm255, %v242, 0.0
        %266 = vadd.xlane.f32.xlu0 %v265
        %v267 = vpop.xlane.xlu0 %266
        %v268 = vsel %vm255, %v243, 0.0
        %269 = vadd.xlane.f32.xlu0 %v268
        %v270 = vpop.xlane.xlu0 %269
        %v271 = vsel %vm255, %v244, 0.0
        %272 = vadd.xlane.f32.xlu0 %v271
        %v273 = vpop.xlane.xlu0 %272
        %v274 = vsel %vm255, %v245, 0.0
        %275 = vadd.xlane.f32.xlu0 %v274
        %v276 = vpop.xlane.xlu0 %275
        %v277 = vsel %vm255, %v246, 0.0
        %278 = vadd.xlane.f32.xlu0 %v277
        %v279 = vpop.xlane.xlu0 %278
        %v280 = vsel %vm255, %v247, 0.0
        %281 = vadd.xlane.f32.xlu0 %v280
        %v282 = vpop.xlane.xlu0 %281
        %v283 = vsel %vm255, %v248, 0.0
        %284 = vadd.xlane.f32.xlu0 %v283
        %v285 = vpop.xlane.xlu0 %284
        %v286 = vsel %vm255, %v249, 0.0
        %287 = vadd.xlane.f32.xlu0 %v286
        %v288 = vpop.xlane.xlu0 %287
        %v289 = vsel %vm255, %v250, 0.0
        %290 = vadd.xlane.f32.xlu0 %v289
        %v291 = vpop.xlane.xlu0 %290
        %v292 = vsel %vm255, %v251, 0.0
        %293 = vadd.xlane.f32.xlu0 %v292
        %v294 = vpop.xlane.xlu0 %293
        %v295 = vsel %vm255, %v252, 0.0
        %296 = vadd.xlane.f32.xlu0 %v295
        %v297 = vpop.xlane.xlu0 %296
        %v298 = vsel %vm255, %v253, 0.0
        %299 = vadd.xlane.f32.xlu0 %v298
        %v300 = vpop.xlane.xlu0 %299
        %v301 = vsel %vm255, %v254, 0.0
        %302 = vadd.xlane.f32.xlu0 %v301
        %v303 = vpop.xlane.xlu0 %302
        %v304 = vmax.f32 %v258, 1e-16
        %v305 = vmax.f32 %v261, 1e-16
        %v306 = vmax.f32 %v264, 1e-16
        %v307 = vmax.f32 %v267, 1e-16
        %v308 = vmax.f32 %v270, 1e-16
        %v309 = vmax.f32 %v273, 1e-16
        %v310 = vmax.f32 %v276, 1e-16
        %v311 = vmax.f32 %v279, 1e-16
        %v312 = vmax.f32 %v282, 1e-16
        %v313 = vmax.f32 %v285, 1e-16
        %v314 = vmax.f32 %v288, 1e-16
        %v315 = vmax.f32 %v291, 1e-16
        %v316 = vmax.f32 %v294, 1e-16
        %v317 = vmax.f32 %v297, 1e-16
        %v318 = vmax.f32 %v300, 1e-16
        %v319 = vmax.f32 %v303, 1e-16
        %v320 = vrsqrt.pop %v304
        %v321 = vrsqrt.pop %v305
        %v322 = vrsqrt.pop %v306
        %v323 = vrsqrt.pop %v307
        %v324 = vrsqrt.pop %v308
        %v325 = vrsqrt.pop %v309
        %v326 = vrsqrt.pop %v310
        %v327 = vrsqrt.pop %v311
        %v328 = vrsqrt.pop %v312
        %v329 = vrsqrt.pop %v313
        %v330 = vrsqrt.pop %v314
        %v331 = vrsqrt.pop %v315
        %v332 = vrsqrt.pop %v316
        %v333 = vrsqrt.pop %v317
        %v334 = vrsqrt.pop %v318
        %v335 = vrsqrt.pop %v319
        %v336 = vmul.f32 %v223, %v320
        %v337 = vmul.f32 %v224, %v321
        %v338 = vmul.f32 %v225, %v322
        %v339 = vmul.f32 %v226, %v323
        %v340 = vmul.f32 %v227, %v324
        %v341 = vmul.f32 %v228, %v325
        %v342 = vmul.f32 %v229, %v326
        %v343 = vmul.f32 %v230, %v327
        %v344 = vmul.f32 %v231, %v328
        %v345 = vmul.f32 %v232, %v329
        %v346 = vmul.f32 %v233, %v330
        %v347 = vmul.f32 %v234, %v331
        %v348 = vmul.f32 %v235, %v332
        %v349 = vmul.f32 %v236, %v333
        %v350 = vmul.f32 %v237, %v334
        %v351 = vmul.f32 %v238, %v335
        %v352 = vld [vmem:[#allocation2] sm:$0xff]
        %v354 = vsel %vm255, %v352, 0
        %v357 = vsel %vm255, %v336, 0
        %v360 = vsel %vm255, %v337, 0
        %v363 = vsel %vm255, %v338, 0
        %v366 = vsel %vm255, %v339, 0
        %v369 = vsel %vm255, %v340, 0
        %v372 = vsel %vm255, %v341, 0
        %v375 = vsel %vm255, %v342, 0
        %v378 = vsel %vm255, %v343, 0
        %v381 = vsel %vm255, %v344, 0
        %v384 = vsel %vm255, %v345, 0
        %v387 = vsel %vm255, %v346, 0
        %v390 = vsel %vm255, %v347, 0
        %v393 = vsel %vm255, %v348, 0
        %v396 = vsel %vm255, %v349, 0
        %v399 = vsel %vm255, %v350, 0
        %v402 = vsel %vm255, %v351, 0
        %404 = vmatprep.subr.mxu0 0.0
        %405 = vmatpush1.xpose.msra.mxu0 %v357
        %406 = vmatprep.subr.mxu0 0.0
        %407 = vmatpush1.xpose.msra.mxu0 %v360
        %408 = vmatprep.subr.mxu0 0.0
        %409 = vmatpush1.xpose.msra.mxu0 %v363
        %410 = vmatprep.subr.mxu0 0.0
        %411 = vmatpush1.xpose.msra.mxu0 %v366
        %412 = vmatprep.subr.mxu0 0.0
        %413 = vmatpush1.xpose.msra.mxu0 %v369
        %414 = vmatprep.subr.mxu0 0.0
        %415 = vmatpush1.xpose.msra.mxu0 %v372
        %416 = vmatprep.subr.mxu0 0.0
        %417 = vmatpush1.xpose.msra.mxu0 %v375
        %418 = vmatprep.subr.mxu0 0.0
        %419 = vmatpush1.xpose.msra.mxu0 %v378
        %420 = vmatprep.subr.mxu0 0.0
        %421 = vmatpush1.xpose.msra.mxu0 %v381
        %422 = vmatprep.subr.mxu0 0.0
        %423 = vmatpush1.xpose.msra.mxu0 %v384
        %424 = vmatprep.subr.mxu0 0.0
        %425 = vmatpush1.xpose.msra.mxu0 %v387
        %426 = vmatprep.subr.mxu0 0.0
        %427 = vmatpush1.xpose.msra.mxu0 %v390
        %428 = vmatprep.subr.mxu0 0.0
        %429 = vmatpush1.xpose.msra.mxu0 %v393
        %430 = vmatprep.subr.mxu0 0.0
        %431 = vmatpush1.xpose.msra.mxu0 %v396
        %432 = vmatprep.subr.mxu0 0.0
        %433 = vmatpush1.xpose.msra.mxu0 %v399
        %434 = vmatprep.subr.mxu0 0.0
        %435 = vmatpush1.xpose.msra.mxu0 %v402
        %436 = vmatprep.subr.mxu0 0.0
        %437 = vmatpush1.xpose.msra.mxu0 0.0
        %438 = vmatprep.subr.mxu0 0.0
        %439 = vmatpush1.xpose.msra.mxu0 0.0
        %440 = vmatprep.subr.mxu0 0.0
        %441 = vmatpush1.xpose.msra.mxu0 0.0
        %442 = vmatprep.subr.mxu0 0.0
        %443 = vmatpush1.xpose.msra.mxu0 0.0
        %444 = vmatprep.subr.mxu0 0.0
        %445 = vmatpush1.xpose.msra.mxu0 0.0
        %446 = vmatprep.subr.mxu0 0.0
        %447 = vmatpush1.xpose.msra.mxu0 0.0
        %448 = vmatprep.subr.mxu0 0.0
        %449 = vmatpush1.xpose.msra.mxu0 0.0
        %450 = vmatprep.subr.mxu0 0.0
        %451 = vmatpush1.xpose.msra.mxu0 0.0
        %452 = vmatprep.subr.mxu0 0.0
        %453 = vmatpush1.xpose.msra.mxu0 0.0
        %454 = vmatprep.subr.mxu0 0.0
        %455 = vmatpush1.xpose.msra.mxu0 0.0
        %456 = vmatprep.subr.mxu0 0.0
        %457 = vmatpush1.xpose.msra.mxu0 0.0
        %458 = vmatprep.subr.mxu0 0.0
        %459 = vmatpush1.xpose.msra.mxu0 0.0
        %460 = vmatprep.subr.mxu0 0.0
        %461 = vmatpush1.xpose.msra.mxu0 0.0
        %462 = vmatprep.subr.mxu0 0.0
        %463 = vmatpush1.xpose.msra.mxu0 0.0
        %464 = vmatprep.subr.mxu0 0.0
        %465 = vmatpush1.xpose.msra.mxu0 0.0
        %466 = vmatprep.subr.mxu0 0.0
        %467 = vmatpush1.xpose.msra.mxu0 0.0
        %468 = vmatprep.mubr.f32.mxu0 0.0
        %469 = vmatmul.mubr.f32.gmra.mrb[0].mxu0 %v354
        %v470 = vpop.f32.mrb[0].mxu0
        %v471 = vadd.f32 0.0, %v470
        %v472 = vpop.f32.mrb[0].mxu0
        %473 = vdwg.mxu0
        %474 = vst [vmem:[%s191] sm:$0xff] %v471
        %s475 = sand.u32 %s103, 1
        %s476 = scalar_lea.sflag [#allocation4], %s475
        %s477 = sand.u32 %s103, 1
        %s478 = smul.addr %s477, 8
        %s479 = scalar_lea.vmem [#allocation3], %s478
        // Predicated region
        $region33: #{tpu_custom_call.1} parent=27 // pred_check
          %p480 = pneg %p113
        $region34: #{tpu_custom_call.1} parent=27 // pred_check_branch
          %482 = sbr.rel (%p480) target = $region36
        $region35: #{tpu_custom_call.1} parent=27 // pred_region
          %s484 = ssub.s32 128, 128
          %485 = vsyncadd %s476, %s484
          %s486 = sadd.s32 %s23, %s22
          %s487 = sadd.s32 %s486, %s21
          %s488 = smul.addr %s487, 128
          %s489 = scalar_lea.hbm %s2, %s488
          %s491 = sshll.u32 %s479, 4
          %s492 = int_to_ptr.vmem [resolvable:$true] %s491
          %494 = dma.vmem_to_hbm [thread:$0]  %s492, 128, %s489, %s476
        $region36: #{tpu_custom_call.1} parent=27 // pred_fallthru
          _
      $region28: #{tpu_custom_call.1} parent=5 // pred_fallthru
        _
      %p495 = scmp.le.s32.totalorder 2, %s11
      // Predicated region
      $region37: #{tpu_custom_call.1} parent=5 // pred_check
        %p496 = pneg %p495
      $region38: #{tpu_custom_call.1} parent=5 // pred_check_branch
        %498 = sbr.rel (%p496) target = $region40
      $region39: #{tpu_custom_call.1} parent=5 // pred_region
        %s499 = ssub.s32 %s11, 2
        // Predicated region
        $region41: #{tpu_custom_call.1} parent=39 // pred_check
          %p500 = pneg %p119
        $region42: #{tpu_custom_call.1} parent=39 // pred_check_branch
          %502 = sbr.rel (%p500) target = $region44
        $region43: #{tpu_custom_call.1} parent=39 // pred_region
          %s503 = sand.u32 %s104, 1
          %s504 = scalar_lea.sflag [#allocation4], %s503
          %s505 = sand.u32 %s104, 1
          %s506 = smul.addr %s505, 8
          %s507 = scalar_lea.vmem [#allocation3], %s506
          %508 = dma.done %s504, 128
        $region44: #{tpu_custom_call.1} parent=39 // pred_fallthru
          _
      $region40: #{tpu_custom_call.1} parent=5 // pred_fallthru
        _
    $region6: #{tpu_custom_call.1} parent=1 // loop_footer
      %s15 = sadd.s32 1, %s11
    $region7: #{tpu_custom_call.1} parent=1 // loop_footer_branch
      %10 = sbr.rel target = $region3
    $region8: #{tpu_custom_call.1} parent=1 // loop_exit
      _
    %509 = vsyncpa [#allocation4], 1
    %s510 = scalar_lea.sflag [#allocation4], 1
    %511 = vsyncpa %s510, 1

</llo_original>
